<compile_context>
chip_gen: v5e
topology: v5e:2x2
jax: 0.10.0
libtpu: 0.0.40
codegen_flags: <defaults>
</compile_context>

<pallas_src>
import functools

import jax
import jax.numpy as jnp
from jax import lax
from jax.experimental import pallas as pl
from jax.experimental.pallas import tpu as pltpu


def _round_up(n, m):
    return -(-n // m) * m


def _level_params(h, w, num_levels, stripe):
    """Static (kh, kw, oh, ow) per pyramid level, mirroring the PyTorch module."""
    levels = []
    for i in range(num_levels):
        kh = h // 2 ** i
        kw = w if stripe else w // 2 ** i
        if kh <= 0 or kw <= 0:
            raise ValueError(
                f"num_levels={num_levels} too deep for input {h}x{w}: "
                f"level {i} kernel size would be {kh}x{kw}")
        oh = h // kh
        ow = w // kw
        levels.append((kh, kw, oh, ow))
    return tuple(levels)


def _vmem_budget_bytes():
    """(tile_budget, vmem_limit) tuned per TPU generation."""
    cap = None
    try:
        cap = getattr(pltpu.get_tpu_info(), "vmem_capacity_bytes", None)
    except Exception:
        cap = None
    if cap is None:
        cap = 64 * 1024 * 1024                     # conservative: v7x-sized VMEM
    if cap >= 96 * 1024 * 1024:                    # v5e / v6e: 128 MiB physical
        return 40 * 1024 * 1024, 96 * 1024 * 1024
    return 20 * 1024 * 1024, 48 * 1024 * 1024      # v7x: 64 MiB per TensorCore


def _is_v5():
    try:
        return "v5" in jax.devices()[0].device_kind.lower()
    except Exception:
        return False


def _pick_channel_tile(bs, c, h, w, levels, itemsize, budget_bytes):
    """Choose (channel_tile, padded_C) so double-buffered blocks fit the budget."""
    # VMEM footprint accounts for (8, 128) sublane/lane padding of each block.
    in_per_ch = _round_up(h, 8) * _round_up(w, 128) * itemsize
    out_per_ch = sum(_round_up(oh, 8) * _round_up(ow, 128) * itemsize
                     for (_, _, oh, ow) in levels)
    per_ch = in_per_ch + out_per_ch
    tc_max = max(1, int(budget_bytes // (2 * per_ch)))   # x2: double buffering
    tc_max = min(tc_max, c)
    if bs == 1 and c > 1:
        # Keep >= 2 parallel grid iterations so both v7x TensorCores get work.
        tc_max = min(tc_max, -(-c // 2))

    # Prefer an exact divisor of C (no padding -> no extra HBM traffic).
    tc = 1
    for cand in range(1, tc_max + 1):
        if c % cand == 0:
            tc = cand
    c_pad = c

    # If the best divisor is far below what VMEM allows (prime / awkward C),
    # pad channels slightly (<= ~12.5%) to keep tiles big and the grid small.
    if tc * 4 < tc_max:
        max_pad = c + max(1, c // 8)
        for cand in range(tc_max, tc, -1):
            padded = -(-c // cand) * cand
            if padded <= max_pad:
                tc, c_pad = cand, padded
                break
    return tc, c_pad


def _reduce(v, axis, pool_type):
    if pool_type == 'max_pool':
        return jnp.max(v, axis=axis, keepdims=True)
    return jnp.sum(v, axis=axis, keepdims=True)


def _place(dst, piece, axis, idx):
    """Insert `piece` (size 1 along `axis`) at static position `idx` of `dst`."""
    sel = lax.broadcasted_iota(jnp.int32, dst.shape, axis) == idx
    return jnp.where(sel, jnp.broadcast_to(piece, dst.shape), dst)


def _spp_kernel(x_ref, *o_refs, levels, pool_type, compute_dtype, unroll_limit):
    # x_ref block: (1, TC, H, W)   o_refs[i] block: (1, TC, OH_i, OW_i)
    for lvl, (kh, kw, oh, ow) in enumerate(levels):
        o_ref = o_refs[lvl]
        tc = o_ref.shape[1]
        wl = ow * kw                       # used width (trailing cols dropped)
        scale = 1.0 / float(kh * kw)

        if oh + ow <= unroll_limit:
            # ---- separable reduction, fully unrolled, ONE store per level ----
            # Stage 1: reduce H inside each window row-band -> (TC, OH, wl).
            y = jnp.zeros((tc, oh, wl), compute_dtype)
            for oy in range(oh):
                band = x_ref[0, :, pl.ds(oy * kh, kh), pl.ds(0, wl)]
                band = band.astype(compute_dtype)
                y = _place(y, _reduce(band, 1, pool_type), 1, oy)
            # Stage 2: reduce W inside each window column-band -> (TC, OH, OW).
            res = jnp.zeros((tc, oh, ow), compute_dtype)
            for ox in range(ow):
                seg = y[:, :, ox * kw:(ox + 1) * kw]
                res = _place(res, _reduce(seg, 2, pool_type), 2, ox)
            if pool_type == 'avg_pool':
                res = res * scale
            o_ref[0, :, :, :] = res.astype(o_ref.dtype)
        else:
            # TODO(synk): deep-pyramid fallback keeps program size bounded via
            # fori_loop at the cost of per-window masked stores.
            def body(idx, carry):
                oy = idx // ow
                ox = idx % ow
                win = x_ref[0, :, pl.ds(oy * kh, kh), pl.ds(ox * kw, kw)]
                win = win.astype(compute_dtype)
                r = _reduce(_reduce(win, 2, pool_type), 1, pool_type)
                if pool_type == 'avg_pool':
                    r = r * scale
                o_ref[0, :, pl.ds(oy, 1), pl.ds(ox, 1)] = r.astype(o_ref.dtype)
                return carry
            lax.fori_loop(0, oh * ow, body, 0)


def spatial_pyramid_pooling(x, num_levels, pool_type='max_pool', stripe=False):
    """Equivalent of SpatialPyramidPooling.forward for NCHW input x."""
    assert pool_type in ('max_pool', 'avg_pool')
    bs, c, h, w = x.shape
    levels = _level_params(h, w, num_levels, stripe)
    itemsize = jnp.dtype(x.dtype).itemsize

    tile_budget, vmem_limit = _vmem_budget_bytes()
    tc, c_pad = _pick_channel_tile(bs, c, h, w, levels, itemsize, tile_budget)
    if c_pad != c:
        x = jnp.pad(x, ((0, 0), (0, c_pad - c), (0, 0), (0, 0)))

    if pool_type == 'avg_pool':
        compute_dtype = jnp.float32        # exact mean in f32
    elif jnp.issubdtype(x.dtype, jnp.floating) and itemsize < 4 and _is_v5():
        compute_dtype = jnp.float32        # v5e VPU has no native bf16 ALU
    else:
        compute_dtype = x.dtype

    grid = (bs, c_pad // tc)
    in_specs = [pl.BlockSpec((1, tc, h, w), lambda b, ct: (b, ct, 0, 0))]
    out_shape = tuple(jax.ShapeDtypeStruct((bs, c_pad, oh, ow), x.dtype)
                      for (_, _, oh, ow) in levels)
    out_specs = tuple(pl.BlockSpec((1, tc, oh, ow), lambda b, ct: (b, ct, 0, 0))
                      for (_, _, oh, ow) in levels)

    flops = bs * c_pad * sum(oh * ow * kh * kw for (kh, kw, oh, ow) in levels)
    bytes_accessed = (bs * c_pad * h * w * itemsize
                      + sum(bs * c_pad * oh * ow * itemsize
                            for (_, _, oh, ow) in levels))

    kernel = functools.partial(_spp_kernel, levels=levels, pool_type=pool_type,
                               compute_dtype=compute_dtype, unroll_limit=64)
    outs = pl.pallas_call(
        kernel,
        out_shape=out_shape,
        grid=grid,
        in_specs=in_specs,
        out_specs=out_specs,
        compiler_params=pltpu.CompilerParams(
            dimension_semantics=("parallel", "parallel"),
            vmem_limit_bytes=vmem_limit),
        cost_estimate=pl.CostEstimate(
            flops=flops, transcendentals=0, bytes_accessed=bytes_accessed),
    )(x)

    # Layout plumbing on the tiny pooled outputs only: drop channel padding,
    # then (B, C, OH, OW) -> (B, -1) is PyTorch's channel-major flatten.
    pieces = []
    for o in outs:
        if c_pad != c:
            o = o[:, :c]
        pieces.append(o.reshape(bs, -1))
    return jnp.concatenate(pieces, axis=-1)


def _reference_spp(x, num_levels, pool_type='max_pool', stripe=False):
    """Pure-jnp reference mirroring the PyTorch forward (for verification)."""
    bs, c, h, w = x.shape
    outs = []
    for i in range(num_levels):
        kh = h // 2 ** i
        kw = w if stripe else w // 2 ** i
        oh = h // kh
        ow = w // kw
        xc = x[:, :, :oh * kh, :ow * kw]
        xr = xc.reshape(bs, c, oh, kh, ow, kw)
        if pool_type == 'max_pool':
            pooled = jnp.max(xr, axis=(3, 5))
        else:
            pooled = jnp.mean(xr.astype(jnp.float32), axis=(3, 5)).astype(x.dtype)
        outs.append(pooled.reshape(bs, -1))
    return jnp.concatenate(outs, axis=-1)


if __name__ == "__main__":
    key = jax.random.PRNGKey(0)
    # Small NCHW input consistent with the module: batch=2, channels=4, 16x16.
    x = jax.random.normal(key, (2, 4, 16, 16), dtype=jnp.float32)
    num_levels = 3

    # max pooling variant
    out_max = jax.block_until_ready(
        spatial_pyramid_pooling(x, num_levels, pool_type='max_pool'))
    ref_max = _reference_spp(x, num_levels, pool_type='max_pool')
    assert out_max.shape == (2, 4 * (1 + 4 + 16)), out_max.shape
    assert jnp.allclose(out_max, ref_max, atol=1e-6, rtol=1e-6)

    # average pooling variant
    out_avg = jax.block_until_ready(
        spatial_pyramid_pooling(x, num_levels, pool_type='avg_pool'))
    ref_avg = _reference_spp(x, num_levels, pool_type='avg_pool')
    assert jnp.allclose(out_avg, ref_avg, atol=1e-5, rtol=1e-5)

    # stripe variant (kernel_w forced to full width)
    out_stripe = jax.block_until_ready(
        spatial_pyramid_pooling(x, num_levels, pool_type='max_pool', stripe=True))
    ref_stripe = _reference_spp(x, num_levels, pool_type='max_pool', stripe=True)
    assert out_stripe.shape == (2, 4 * (1 + 2 + 4)), out_stripe.shape
    assert jnp.allclose(out_stripe, ref_stripe, atol=1e-6, rtol=1e-6)

    print("KERNEL_OK")
</pallas_src>

<mosaic_0001>
module attributes {stable_mosaic.version = 11 : i64} {
  func.func @_spp_kernel(%arg0: i32, %arg1: i32, %arg2: memref<1x4x16x16xf32, #tpu.memory_space<vmem>>, %arg3: memref<1x4x1x1xf32, #tpu.memory_space<vmem>>, %arg4: memref<1x4x2x2xf32, #tpu.memory_space<vmem>>, %arg5: memref<1x4x4x4xf32, #tpu.memory_space<vmem>>) attributes {dimension_semantics = [#tpu.dimension_semantics<parallel>, #tpu.dimension_semantics<parallel>], iteration_bounds = array<i64: 2, 1>, scalar_prefetch = 0 : i64, scratch_operands = 0 : i64, tpu.core_type = #tpu.core_type<tc>, window_params = [{transform_indices = @transform_0, window_bounds = array<i64: 1, 4, 16, 16>}, {transform_indices = @transform_1, window_bounds = array<i64: 1, 4, 1, 1>}, {transform_indices = @transform_2, window_bounds = array<i64: 1, 4, 2, 2>}, {transform_indices = @transform_3, window_bounds = array<i64: 1, 4, 4, 4>}]} {
    %cst = arith.constant 0.000000e+00 : f32
    %0 = vector.broadcast %cst : f32 to vector<4x1x16xf32>
    %c0 = arith.constant 0 : index
    %c0_0 = arith.constant 0 : index
    %c0_1 = arith.constant 0 : index
    %c0_2 = arith.constant 0 : index
    %1 = vector.load %arg2[%c0, %c0_0, %c0_1, %c0_2] : memref<1x4x16x16xf32, #tpu.memory_space<vmem>>, vector<1x4x16x16xf32>
    %2 = vector.shape_cast %1 : vector<1x4x16x16xf32> to vector<4x16x16xf32>
    %cst_3 = arith.constant dense<0xFF800000> : vector<4x16xf32>
    %3 = vector.multi_reduction <maximumf>, %2, %cst_3 [1] : vector<4x16x16xf32> to vector<4x16xf32>
    %4 = vector.shape_cast %3 : vector<4x16xf32> to vector<4x1x16xf32>
    %5 = tpu.iota {dimensions = array<i32: 1>} : vector<4x1x16xi32>
    %c0_i32 = arith.constant 0 : i32
    %6 = vector.broadcast %c0_i32 : i32 to vector<4x1x16xi32>
    %7 = arith.cmpi eq, %5, %6 : vector<4x1x16xi32>
    %8 = arith.select %7, %4, %0 : vector<4x1x16xi1>, vector<4x1x16xf32>
    %cst_4 = arith.constant 0.000000e+00 : f32
    %9 = vector.broadcast %cst_4 : f32 to vector<4x1x1xf32>
    %cst_5 = arith.constant dense<0xFF800000> : vector<4x1xf32>
    %10 = vector.multi_reduction <maximumf>, %8, %cst_5 [2] : vector<4x1x16xf32> to vector<4x1xf32>
    %11 = vector.shape_cast %10 : vector<4x1xf32> to vector<4x1x1xf32>
    %12 = tpu.iota {dimensions = array<i32: 2>} : vector<4x1x1xi32>
    %c0_i32_6 = arith.constant 0 : i32
    %13 = vector.broadcast %c0_i32_6 : i32 to vector<4x1x1xi32>
    %14 = arith.cmpi eq, %12, %13 : vector<4x1x1xi32>
    %15 = arith.select %14, %11, %9 : vector<4x1x1xi1>, vector<4x1x1xf32>
    %c0_7 = arith.constant 0 : index
    %c0_8 = arith.constant 0 : index
    %c0_9 = arith.constant 0 : index
    %c0_10 = arith.constant 0 : index
    %16 = vector.load %arg3[%c0_7, %c0_8, %c0_9, %c0_10] : memref<1x4x1x1xf32, #tpu.memory_space<vmem>>, vector<1x4x1x1xf32>
    %17 = vector.shape_cast %16 : vector<1x4x1x1xf32> to vector<4x1x1xf32>
    %18 = vector.shape_cast %15 : vector<4x1x1xf32> to vector<1x4x1x1xf32>
    tpu.vector_store %arg3[%c0_7, %c0_8, %c0_9, %c0_10], %18 {strides = array<i32>} : memref<1x4x1x1xf32, #tpu.memory_space<vmem>>, vector<1x4x1x1xf32>,
    %cst_11 = arith.constant 0.000000e+00 : f32
    %19 = vector.broadcast %cst_11 : f32 to vector<4x2x16xf32>
    %c0_12 = arith.constant 0 : index
    %c0_13 = arith.constant 0 : index
    %c0_14 = arith.constant 0 : index
    %c0_15 = arith.constant 0 : index
    %20 = vector.load %arg2[%c0_12, %c0_13, %c0_14, %c0_15] : memref<1x4x16x16xf32, #tpu.memory_space<vmem>>, vector<1x4x8x16xf32>
    %21 = vector.shape_cast %20 : vector<1x4x8x16xf32> to vector<4x8x16xf32>
    %cst_16 = arith.constant dense<0xFF800000> : vector<4x16xf32>
    %22 = vector.multi_reduction <maximumf>, %21, %cst_16 [1] : vector<4x8x16xf32> to vector<4x16xf32>
    %23 = vector.shape_cast %22 : vector<4x16xf32> to vector<4x1x16xf32>
    %24 = tpu.iota {dimensions = array<i32: 1>} : vector<4x2x16xi32>
    %c0_i32_17 = arith.constant 0 : i32
    %25 = vector.broadcast %c0_i32_17 : i32 to vector<4x2x16xi32>
    %26 = arith.cmpi eq, %24, %25 : vector<4x2x16xi32>
    %27 = vector.shape_cast %23 : vector<4x1x16xf32> to vector<4x1x16xf32>
    %28 = vector.broadcast %27 : vector<4x1x16xf32> to vector<4x2x16xf32>
    %29 = arith.select %26, %28, %19 : vector<4x2x16xi1>, vector<4x2x16xf32>
    %c0_18 = arith.constant 0 : index
    %c0_19 = arith.constant 0 : index
    %c8 = arith.constant 8 : index
    %c0_20 = arith.constant 0 : index
    %30 = vector.load %arg2[%c0_18, %c0_19, %c8, %c0_20] : memref<1x4x16x16xf32, #tpu.memory_space<vmem>>, vector<1x4x8x16xf32>
    %31 = vector.shape_cast %30 : vector<1x4x8x16xf32> to vector<4x8x16xf32>
    %cst_21 = arith.constant dense<0xFF800000> : vector<4x16xf32>
    %32 = vector.multi_reduction <maximumf>, %31, %cst_21 [1] : vector<4x8x16xf32> to vector<4x16xf32>
    %33 = vector.shape_cast %32 : vector<4x16xf32> to vector<4x1x16xf32>
    %34 = tpu.iota {dimensions = array<i32: 1>} : vector<4x2x16xi32>
    %c1_i32 = arith.constant 1 : i32
    %35 = vector.broadcast %c1_i32 : i32 to vector<4x2x16xi32>
    %36 = arith.cmpi eq, %34, %35 : vector<4x2x16xi32>
    %37 = vector.shape_cast %33 : vector<4x1x16xf32> to vector<4x1x16xf32>
    %38 = vector.broadcast %37 : vector<4x1x16xf32> to vector<4x2x16xf32>
    %39 = arith.select %36, %38, %29 : vector<4x2x16xi1>, vector<4x2x16xf32>
    %cst_22 = arith.constant 0.000000e+00 : f32
    %40 = vector.broadcast %cst_22 : f32 to vector<4x2x2xf32>
    %41 = vector.extract_strided_slice %39 {offsets = [0, 0, 0], sizes = [4, 2, 8], strides = [1, 1, 1]} : vector<4x2x16xf32> to vector<4x2x8xf32>
    %cst_23 = arith.constant dense<0xFF800000> : vector<4x2xf32>
    %42 = vector.multi_reduction <maximumf>, %41, %cst_23 [2] : vector<4x2x8xf32> to vector<4x2xf32>
    %43 = vector.shape_cast %42 : vector<4x2xf32> to vector<4x2x1xf32>
    %44 = tpu.iota {dimensions = array<i32: 2>} : vector<4x2x2xi32>
    %c0_i32_24 = arith.constant 0 : i32
    %45 = vector.broadcast %c0_i32_24 : i32 to vector<4x2x2xi32>
    %46 = arith.cmpi eq, %44, %45 : vector<4x2x2xi32>
    %47 = vector.shape_cast %43 : vector<4x2x1xf32> to vector<4x2x1xf32>
    %48 = vector.broadcast %47 : vector<4x2x1xf32> to vector<4x2x2xf32>
    %49 = arith.select %46, %48, %40 : vector<4x2x2xi1>, vector<4x2x2xf32>
    %50 = vector.extract_strided_slice %39 {offsets = [0, 0, 8], sizes = [4, 2, 8], strides = [1, 1, 1]} : vector<4x2x16xf32> to vector<4x2x8xf32>
    %cst_25 = arith.constant dense<0xFF800000> : vector<4x2xf32>
    %51 = vector.multi_reduction <maximumf>, %50, %cst_25 [2] : vector<4x2x8xf32> to vector<4x2xf32>
    %52 = vector.shape_cast %51 : vector<4x2xf32> to vector<4x2x1xf32>
    %53 = tpu.iota {dimensions = array<i32: 2>} : vector<4x2x2xi32>
    %c1_i32_26 = arith.constant 1 : i32
    %54 = vector.broadcast %c1_i32_26 : i32 to vector<4x2x2xi32>
    %55 = arith.cmpi eq, %53, %54 : vector<4x2x2xi32>
    %56 = vector.shape_cast %52 : vector<4x2x1xf32> to vector<4x2x1xf32>
    %57 = vector.broadcast %56 : vector<4x2x1xf32> to vector<4x2x2xf32>
    %58 = arith.select %55, %57, %49 : vector<4x2x2xi1>, vector<4x2x2xf32>
    %c0_27 = arith.constant 0 : index
    %c0_28 = arith.constant 0 : index
    %c0_29 = arith.constant 0 : index
    %c0_30 = arith.constant 0 : index
    %59 = vector.load %arg4[%c0_27, %c0_28, %c0_29, %c0_30] : memref<1x4x2x2xf32, #tpu.memory_space<vmem>>, vector<1x4x2x2xf32>
    %60 = vector.shape_cast %59 : vector<1x4x2x2xf32> to vector<4x2x2xf32>
    %61 = vector.shape_cast %58 : vector<4x2x2xf32> to vector<1x4x2x2xf32>
    tpu.vector_store %arg4[%c0_27, %c0_28, %c0_29, %c0_30], %61 {strides = array<i32>} : memref<1x4x2x2xf32, #tpu.memory_space<vmem>>, vector<1x4x2x2xf32>,
    %cst_31 = arith.constant 0.000000e+00 : f32
    %62 = vector.broadcast %cst_31 : f32 to vector<4x4x16xf32>
    %c0_32 = arith.constant 0 : index
    %c0_33 = arith.constant 0 : index
    %c0_34 = arith.constant 0 : index
    %c0_35 = arith.constant 0 : index
    %63 = vector.load %arg2[%c0_32, %c0_33, %c0_34, %c0_35] : memref<1x4x16x16xf32, #tpu.memory_space<vmem>>, vector<1x4x4x16xf32>
    %64 = vector.shape_cast %63 : vector<1x4x4x16xf32> to vector<4x4x16xf32>
    %cst_36 = arith.constant dense<0xFF800000> : vector<4x16xf32>
    %65 = vector.multi_reduction <maximumf>, %64, %cst_36 [1] : vector<4x4x16xf32> to vector<4x16xf32>
    %66 = vector.shape_cast %65 : vector<4x16xf32> to vector<4x1x16xf32>
    %67 = tpu.iota {dimensions = array<i32: 1>} : vector<4x4x16xi32>
    %c0_i32_37 = arith.constant 0 : i32
    %68 = vector.broadcast %c0_i32_37 : i32 to vector<4x4x16xi32>
    %69 = arith.cmpi eq, %67, %68 : vector<4x4x16xi32>
    %70 = vector.shape_cast %66 : vector<4x1x16xf32> to vector<4x1x16xf32>
    %71 = vector.broadcast %70 : vector<4x1x16xf32> to vector<4x4x16xf32>
    %72 = arith.select %69, %71, %62 : vector<4x4x16xi1>, vector<4x4x16xf32>
    %c0_38 = arith.constant 0 : index
    %c0_39 = arith.constant 0 : index
    %c4 = arith.constant 4 : index
    %c0_40 = arith.constant 0 : index
    %73 = vector.load %arg2[%c0_38, %c0_39, %c4, %c0_40] : memref<1x4x16x16xf32, #tpu.memory_space<vmem>>, vector<1x4x4x16xf32>
    %74 = vector.shape_cast %73 : vector<1x4x4x16xf32> to vector<4x4x16xf32>
    %cst_41 = arith.constant dense<0xFF800000> : vector<4x16xf32>
    %75 = vector.multi_reduction <maximumf>, %74, %cst_41 [1] : vector<4x4x16xf32> to vector<4x16xf32>
    %76 = vector.shape_cast %75 : vector<4x16xf32> to vector<4x1x16xf32>
    %77 = tpu.iota {dimensions = array<i32: 1>} : vector<4x4x16xi32>
    %c1_i32_42 = arith.constant 1 : i32
    %78 = vector.broadcast %c1_i32_42 : i32 to vector<4x4x16xi32>
    %79 = arith.cmpi eq, %77, %78 : vector<4x4x16xi32>
    %80 = vector.shape_cast %76 : vector<4x1x16xf32> to vector<4x1x16xf32>
    %81 = vector.broadcast %80 : vector<4x1x16xf32> to vector<4x4x16xf32>
    %82 = arith.select %79, %81, %72 : vector<4x4x16xi1>, vector<4x4x16xf32>
    %c0_43 = arith.constant 0 : index
    %c0_44 = arith.constant 0 : index
    %c8_45 = arith.constant 8 : index
    %c0_46 = arith.constant 0 : index
    %83 = vector.load %arg2[%c0_43, %c0_44, %c8_45, %c0_46] : memref<1x4x16x16xf32, #tpu.memory_space<vmem>>, vector<1x4x4x16xf32>
    %84 = vector.shape_cast %83 : vector<1x4x4x16xf32> to vector<4x4x16xf32>
    %cst_47 = arith.constant dense<0xFF800000> : vector<4x16xf32>
    %85 = vector.multi_reduction <maximumf>, %84, %cst_47 [1] : vector<4x4x16xf32> to vector<4x16xf32>
    %86 = vector.shape_cast %85 : vector<4x16xf32> to vector<4x1x16xf32>
    %87 = tpu.iota {dimensions = array<i32: 1>} : vector<4x4x16xi32>
    %c2_i32 = arith.constant 2 : i32
    %88 = vector.broadcast %c2_i32 : i32 to vector<4x4x16xi32>
    %89 = arith.cmpi eq, %87, %88 : vector<4x4x16xi32>
    %90 = vector.shape_cast %86 : vector<4x1x16xf32> to vector<4x1x16xf32>
    %91 = vector.broadcast %90 : vector<4x1x16xf32> to vector<4x4x16xf32>
    %92 = arith.select %89, %91, %82 : vector<4x4x16xi1>, vector<4x4x16xf32>
    %c0_48 = arith.constant 0 : index
    %c0_49 = arith.constant 0 : index
    %c12 = arith.constant 12 : index
    %c0_50 = arith.constant 0 : index
    %93 = vector.load %arg2[%c0_48, %c0_49, %c12, %c0_50] : memref<1x4x16x16xf32, #tpu.memory_space<vmem>>, vector<1x4x4x16xf32>
    %94 = vector.shape_cast %93 : vector<1x4x4x16xf32> to vector<4x4x16xf32>
    %cst_51 = arith.constant dense<0xFF800000> : vector<4x16xf32>
    %95 = vector.multi_reduction <maximumf>, %94, %cst_51 [1] : vector<4x4x16xf32> to vector<4x16xf32>
    %96 = vector.shape_cast %95 : vector<4x16xf32> to vector<4x1x16xf32>
    %97 = tpu.iota {dimensions = array<i32: 1>} : vector<4x4x16xi32>
    %c3_i32 = arith.constant 3 : i32
    %98 = vector.broadcast %c3_i32 : i32 to vector<4x4x16xi32>
    %99 = arith.cmpi eq, %97, %98 : vector<4x4x16xi32>
    %100 = vector.shape_cast %96 : vector<4x1x16xf32> to vector<4x1x16xf32>
    %101 = vector.broadcast %100 : vector<4x1x16xf32> to vector<4x4x16xf32>
    %102 = arith.select %99, %101, %92 : vector<4x4x16xi1>, vector<4x4x16xf32>
    %cst_52 = arith.constant 0.000000e+00 : f32
    %103 = vector.broadcast %cst_52 : f32 to vector<4x4x4xf32>
    %104 = vector.extract_strided_slice %102 {offsets = [0, 0, 0], sizes = [4, 4, 4], strides = [1, 1, 1]} : vector<4x4x16xf32> to vector<4x4x4xf32>
    %cst_53 = arith.constant dense<0xFF800000> : vector<4x4xf32>
    %105 = vector.multi_reduction <maximumf>, %104, %cst_53 [2] : vector<4x4x4xf32> to vector<4x4xf32>
    %106 = vector.shape_cast %105 : vector<4x4xf32> to vector<4x4x1xf32>
    %107 = tpu.iota {dimensions = array<i32: 2>} : vector<4x4x4xi32>
    %c0_i32_54 = arith.constant 0 : i32
    %108 = vector.broadcast %c0_i32_54 : i32 to vector<4x4x4xi32>
    %109 = arith.cmpi eq, %107, %108 : vector<4x4x4xi32>
    %110 = vector.shape_cast %106 : vector<4x4x1xf32> to vector<4x4x1xf32>
    %111 = vector.broadcast %110 : vector<4x4x1xf32> to vector<4x4x4xf32>
    %112 = arith.select %109, %111, %103 : vector<4x4x4xi1>, vector<4x4x4xf32>
    %113 = vector.extract_strided_slice %102 {offsets = [0, 0, 4], sizes = [4, 4, 4], strides = [1, 1, 1]} : vector<4x4x16xf32> to vector<4x4x4xf32>
    %cst_55 = arith.constant dense<0xFF800000> : vector<4x4xf32>
    %114 = vector.multi_reduction <maximumf>, %113, %cst_55 [2] : vector<4x4x4xf32> to vector<4x4xf32>
    %115 = vector.shape_cast %114 : vector<4x4xf32> to vector<4x4x1xf32>
    %116 = tpu.iota {dimensions = array<i32: 2>} : vector<4x4x4xi32>
    %c1_i32_56 = arith.constant 1 : i32
    %117 = vector.broadcast %c1_i32_56 : i32 to vector<4x4x4xi32>
    %118 = arith.cmpi eq, %116, %117 : vector<4x4x4xi32>
    %119 = vector.shape_cast %115 : vector<4x4x1xf32> to vector<4x4x1xf32>
    %120 = vector.broadcast %119 : vector<4x4x1xf32> to vector<4x4x4xf32>
    %121 = arith.select %118, %120, %112 : vector<4x4x4xi1>, vector<4x4x4xf32>
    %122 = vector.extract_strided_slice %102 {offsets = [0, 0, 8], sizes = [4, 4, 4], strides = [1, 1, 1]} : vector<4x4x16xf32> to vector<4x4x4xf32>
    %cst_57 = arith.constant dense<0xFF800000> : vector<4x4xf32>
    %123 = vector.multi_reduction <maximumf>, %122, %cst_57 [2] : vector<4x4x4xf32> to vector<4x4xf32>
    %124 = vector.shape_cast %123 : vector<4x4xf32> to vector<4x4x1xf32>
    %125 = tpu.iota {dimensions = array<i32: 2>} : vector<4x4x4xi32>
    %c2_i32_58 = arith.constant 2 : i32
    %126 = vector.broadcast %c2_i32_58 : i32 to vector<4x4x4xi32>
    %127 = arith.cmpi eq, %125, %126 : vector<4x4x4xi32>
    %128 = vector.shape_cast %124 : vector<4x4x1xf32> to vector<4x4x1xf32>
    %129 = vector.broadcast %128 : vector<4x4x1xf32> to vector<4x4x4xf32>
    %130 = arith.select %127, %129, %121 : vector<4x4x4xi1>, vector<4x4x4xf32>
    %131 = vector.extract_strided_slice %102 {offsets = [0, 0, 12], sizes = [4, 4, 4], strides = [1, 1, 1]} : vector<4x4x16xf32> to vector<4x4x4xf32>
    %cst_59 = arith.constant dense<0xFF800000> : vector<4x4xf32>
    %132 = vector.multi_reduction <maximumf>, %131, %cst_59 [2] : vector<4x4x4xf32> to vector<4x4xf32>
    %133 = vector.shape_cast %132 : vector<4x4xf32> to vector<4x4x1xf32>
    %134 = tpu.iota {dimensions = array<i32: 2>} : vector<4x4x4xi32>
    %c3_i32_60 = arith.constant 3 : i32
    %135 = vector.broadcast %c3_i32_60 : i32 to vector<4x4x4xi32>
    %136 = arith.cmpi eq, %134, %135 : vector<4x4x4xi32>
    %137 = vector.shape_cast %133 : vector<4x4x1xf32> to vector<4x4x1xf32>
    %138 = vector.broadcast %137 : vector<4x4x1xf32> to vector<4x4x4xf32>
    %139 = arith.select %136, %138, %130 : vector<4x4x4xi1>, vector<4x4x4xf32>
    %c0_61 = arith.constant 0 : index
    %c0_62 = arith.constant 0 : index
    %c0_63 = arith.constant 0 : index
    %c0_64 = arith.constant 0 : index
    %140 = vector.load %arg5[%c0_61, %c0_62, %c0_63, %c0_64] : memref<1x4x4x4xf32, #tpu.memory_space<vmem>>, vector<1x4x4x4xf32>
    %141 = vector.shape_cast %140 : vector<1x4x4x4xf32> to vector<4x4x4xf32>
    %142 = vector.shape_cast %139 : vector<4x4x4xf32> to vector<1x4x4x4xf32>
    tpu.vector_store %arg5[%c0_61, %c0_62, %c0_63, %c0_64], %142 {strides = array<i32>} : memref<1x4x4x4xf32, #tpu.memory_space<vmem>>, vector<1x4x4x4xf32>,
    return
  }
  func.func @transform_0(%arg0: i32, %arg1: i32) -> (i32, i32, i32, i32) {
    %c0_i32 = arith.constant 0 : i32
    %c0_i32_0 = arith.constant 0 : i32
    %c0_i32_1 = arith.constant 0 : i32
    return %arg0, %arg1, %c0_i32, %c0_i32_0 : i32, i32, i32, i32
  }
  func.func @transform_1(%arg0: i32, %arg1: i32) -> (i32, i32, i32, i32) {
    %c0_i32 = arith.constant 0 : i32
    %c0_i32_0 = arith.constant 0 : i32
    %c0_i32_1 = arith.constant 0 : i32
    return %arg0, %arg1, %c0_i32, %c0_i32_0 : i32, i32, i32, i32
  }
  func.func @transform_2(%arg0: i32, %arg1: i32) -> (i32, i32, i32, i32) {
    %c0_i32 = arith.constant 0 : i32
    %c0_i32_0 = arith.constant 0 : i32
    %c0_i32_1 = arith.constant 0 : i32
    return %arg0, %arg1, %c0_i32, %c0_i32_0 : i32, i32, i32, i32
  }
  func.func @transform_3(%arg0: i32, %arg1: i32) -> (i32, i32, i32, i32) {
    %c0_i32 = arith.constant 0 : i32
    %c0_i32_0 = arith.constant 0 : i32
    %c0_i32_1 = arith.constant 0 : i32
    return %arg0, %arg1, %c0_i32, %c0_i32_0 : i32, i32, i32, i32
  }
}

</mosaic_0001>

<llo_original>
// kernel: tpu_custom_call.1
$region0: #{tpu_custom_call.1}
  #allocation0 [shape = 'u32[]', space=smem, size = 0x4, offset = 0x4, fixed_abs, tag = 'smem constant byte address 0x4 - core index']
  #allocation1 [shape = 'u32[72,128]{1,0:T(1,128)}', space=vmem, size = 0x9000, scoped, tag = 'internal scratch']
  %s0 = inlined_call_operand.hbm [shape: f32[2,4,16,16], index: 0, kind: input, shape index: {}]
  %s1 = inlined_call_operand.vmem [shape: f32[2,4,1,1], index: 1, kind: output, shape index: {0}]
  %s2 = inlined_call_operand.vmem [shape: f32[2,4,2,2], index: 2, kind: output, shape index: {1}]
  %s3 = inlined_call_operand.hbm [shape: f32[2,4,4,4], index: 3, kind: output, shape index: {2}]
  %4 = xla_tuple %s1, %s2, %s3
  %s5 = sld [smem:[#allocation0]]
  $region57: #{tpu_custom_call.1} parent=0
    _
  %s7 = ssub.s32 1, %s5
  %s8 = scalar_select 0, %s7, %s5
  $region1: #{tpu_custom_call.1} parent=0
    #allocation2 [shape = 'u8[65536]{0}', space=vmem, size = 0x10000, scoped, tag = 'input window, operand 0']
    #allocation3 [shape = 's32[2]{0}', space=sflag, size = 0x8, scoped, tag = 'scoped memory for tpu_custom_call.1']
    #allocation4 [shape = 's32[2]{0}', space=sflag, size = 0x8, scoped, tag = 'scoped memory for tpu_custom_call.1']
    #allocation5 [shape = 'u8[16384]{0}', space=vmem, size = 0x4000, scoped, tag = 'output window, operand 2']
    %9 = vsyncpa [#allocation3], 0
    %s10 = scalar_lea.sflag [#allocation3], 1
    %11 = vsyncpa %s10, 0
    %12 = vsyncpa [#allocation4], 0
    %s13 = scalar_lea.sflag [#allocation4], 1
    %14 = vsyncpa %s13, 0
    loop: start=0, step=1, limit=4
    $region2: #{tpu_custom_call.1} parent=1 // loop_pre_header
      _
    $region3: #{tpu_custom_call.1} parent=1 // loop_header
      %s16 = sphi 0, %s20
      %p17 = scmp.ge.s32.totalorder %s16, 4
      %s23 = sphi 0, %s35
      %s24 = sphi 0, %s31
      %s25 = sphi 0, %s23
      %s26 = sphi 0, %s24
      %s27 = sphi 0, %s25
      %s28 = sphi 0, %s26
      %s40 = sphi 0, %s42
      %s43 = sphi 0, %s40
      %s44 = sphi 0, %s43
      %s60 = sphi 0, %s44
      %s68 = sphi 0, %s70
      %s71 = sphi 0, %s68
      %s72 = sphi 0, %s71
      %s88 = sphi 0, %s72
      %s96 = sphi 0, %s98
      %s99 = sphi 0, %s96
      %s100 = sphi 0, %s99
      %s116 = sphi 0, %s100
      %s124 = sphi 0, %s126
      %s127 = sphi 0, %s124
      %s128 = sphi 0, %s127
      %s144 = sphi 0, %s128
    $region4: #{tpu_custom_call.1} parent=1 // loop_header_branch
      %19 = sbr.rel (%p17) target = $region8
    $region5: #{tpu_custom_call.1} parent=1 // loop_body
      %s21 = ssub.s32 %s16, 1
      %s22 = ssub.s32 %s16, 2
      %s29 = sadd.s32 1, %s24
      %p30 = scmp.ge.s32.totalorder %s29, 1
      %s31 = scalar_select %p30, 0, %s29
      %s32 = sadd.s32 1, %s23
      %s33 = scalar_select %p30, %s32, %s23
      %p34 = scmp.ge.s32.totalorder %s33, 2
      %s35 = scalar_select %p34, 0, %s33
      %s36 = ssub.s32 %s23, %s35
      %s37 = ssub.s32 %s24, %s31
      %s38 = sor.u32 %s36, %s37
      %p39 = scmp.eq.s32.totalorder %s38, 0
      %s41 = sadd.s32 %s40, 1
      %s42 = scalar_select %p39, %s40, %s41
      %p45 = pneg %p39
      %p46 = scmp.eq.s32.totalorder %s16, 1
      %p47 = por %p45, %p46
      %p48 = scmp.ne.s32.totalorder %s40, %s43
      %p49 = scmp.eq.s32.totalorder %s16, 0
      %p50 = por %p48, %p49
      %p51 = scmp.ne.s32.totalorder %s40, %s43
      %p52 = scmp.eq.s32.totalorder %s21, 1
      %p53 = por %p51, %p52
      %p54 = scmp.ne.s32.totalorder %s43, %s44
      %p55 = scmp.eq.s32.totalorder %s21, 0
      %p56 = por %p54, %p55
      %p57 = scmp.ne.s32.totalorder %s43, %s44
      %p58 = scmp.eq.s32.totalorder %s22, 1
      %p59 = por %p57, %p58
      %p61 = scmp.ne.s32.totalorder %s44, %s60
      %p62 = scmp.eq.s32.totalorder %s22, 0
      %p63 = por %p61, %p62
      %s64 = ssub.s32 %s23, %s35
      %s65 = ssub.s32 %s24, %s31
      %s66 = sor.u32 %s64, %s65
      %p67 = scmp.eq.s32.totalorder %s66, 0
      %s69 = sadd.s32 %s68, 1
      %s70 = scalar_select %p67, %s68, %s69
      %p73 = pneg %p67
      %p74 = scmp.eq.s32.totalorder %s16, 1
      %p75 = por %p73, %p74
      %p76 = scmp.ne.s32.totalorder %s68, %s71
      %p77 = scmp.eq.s32.totalorder %s16, 0
      %p78 = por %p76, %p77
      %p79 = scmp.ne.s32.totalorder %s68, %s71
      %p80 = scmp.eq.s32.totalorder %s21, 1
      %p81 = por %p79, %p80
      %p82 = scmp.ne.s32.totalorder %s71, %s72
      %p83 = scmp.eq.s32.totalorder %s21, 0
      %p84 = por %p82, %p83
      %p85 = scmp.ne.s32.totalorder %s71, %s72
      %p86 = scmp.eq.s32.totalorder %s22, 1
      %p87 = por %p85, %p86
      %p89 = scmp.ne.s32.totalorder %s72, %s88
      %p90 = scmp.eq.s32.totalorder %s22, 0
      %p91 = por %p89, %p90
      %s92 = ssub.s32 %s23, %s35
      %s93 = ssub.s32 %s24, %s31
      %s94 = sor.u32 %s92, %s93
      %p95 = scmp.eq.s32.totalorder %s94, 0
      %s97 = sadd.s32 %s96, 1
      %s98 = scalar_select %p95, %s96, %s97
      %p101 = pneg %p95
      %p102 = scmp.eq.s32.totalorder %s16, 1
      %p103 = por %p101, %p102
      %p104 = scmp.ne.s32.totalorder %s96, %s99
      %p105 = scmp.eq.s32.totalorder %s16, 0
      %p106 = por %p104, %p105
      %p107 = scmp.ne.s32.totalorder %s96, %s99
      %p108 = scmp.eq.s32.totalorder %s21, 1
      %p109 = por %p107, %p108
      %p110 = scmp.ne.s32.totalorder %s99, %s100
      %p111 = scmp.eq.s32.totalorder %s21, 0
      %p112 = por %p110, %p111
      %p113 = scmp.ne.s32.totalorder %s99, %s100
      %p114 = scmp.eq.s32.totalorder %s22, 1
      %p115 = por %p113, %p114
      %p117 = scmp.ne.s32.totalorder %s100, %s116
      %p118 = scmp.eq.s32.totalorder %s22, 0
      %p119 = por %p117, %p118
      %s120 = ssub.s32 %s23, %s35
      %s121 = ssub.s32 %s24, %s31
      %s122 = sor.u32 %s120, %s121
      %p123 = scmp.eq.s32.totalorder %s122, 0
      %s125 = sadd.s32 %s124, 1
      %s126 = scalar_select %p123, %s124, %s125
      %p129 = pneg %p123
      %p130 = scmp.eq.s32.totalorder %s16, 1
      %p131 = por %p129, %p130
      %p132 = scmp.ne.s32.totalorder %s124, %s127
      %p133 = scmp.eq.s32.totalorder %s16, 0
      %p134 = por %p132, %p133
      %p135 = scmp.ne.s32.totalorder %s124, %s127
      %p136 = scmp.eq.s32.totalorder %s21, 1
      %p137 = por %p135, %p136
      %p138 = scmp.ne.s32.totalorder %s127, %s128
      %p139 = scmp.eq.s32.totalorder %s21, 0
      %p140 = por %p138, %p139
      %p141 = scmp.ne.s32.totalorder %s127, %s128
      %p142 = scmp.eq.s32.totalorder %s22, 1
      %p143 = por %p141, %p142
      %p145 = scmp.ne.s32.totalorder %s128, %s144
      %p146 = scmp.eq.s32.totalorder %s22, 0
      %p147 = por %p145, %p146
      %p148 = scmp.le.s32.totalorder 1, %s16
      %p149 = scmp.lt.s32.totalorder %s16, 3
      %p150 = pnand %p148, %p149
      %p151 = pneg %p150
      // Predicated region
      $region9: #{tpu_custom_call.1} parent=5 // pred_check
        _
      $region10: #{tpu_custom_call.1} parent=5 // pred_check_branch
        %153 = sbr.rel (%p150) target = $region12
      $region11: #{tpu_custom_call.1} parent=5 // pred_region
        %s154 = ssub.s32 %s16, 1
      $region12: #{tpu_custom_call.1} parent=5 // pred_fallthru
        _
      %p155 = scmp.lt.s32.totalorder %s16, 2
      // Predicated region
      $region13: #{tpu_custom_call.1} parent=5 // pred_check
        %p156 = pneg %p155
      $region14: #{tpu_custom_call.1} parent=5 // pred_check_branch
        %158 = sbr.rel (%p156) target = $region16
      $region15: #{tpu_custom_call.1} parent=5 // pred_region
        // Predicated region
        $region17: #{tpu_custom_call.1} parent=15 // pred_check
          %p159 = pneg %p50
        $region18: #{tpu_custom_call.1} parent=15 // pred_check_branch
          %161 = sbr.rel (%p159) target = $region20
        $region19: #{tpu_custom_call.1} parent=15 // pred_region
          %s162 = sand.u32 %s40, 1
          %s163 = scalar_lea.sflag [#allocation3], %s162
          %s164 = sand.u32 %s40, 1
          %s165 = smul.addr %s164, 64
          %s166 = scalar_lea.vmem [#allocation2], %s165
          %s167 = smul.u32 4, %s24
          %169 = vsyncadd %s163, 0
          %s170 = smul.addr %s167, 2
          %s171 = smul.addr %s23, 8
          %s172 = sadd.s32 %s170, %s171
          %s173 = smul.addr %s172, 8
          %s174 = scalar_lea.hbm %s0, %s173
          %s175 = sshll.u32 %s174, 4
          %s176 = int_to_ptr.hbm [resolvable:$true] %s175
          %s177 = sshll.u32 %s166, 4
          %s178 = int_to_ptr.vmem [resolvable:$true] %s177
          %183 = dma.hbm_to_vmem [thread:$0]  %s176, 1024, %s178, %s163, 128, 128, 8
        $region20: #{tpu_custom_call.1} parent=15 // pred_fallthru
          _
      $region16: #{tpu_custom_call.1} parent=5 // pred_fallthru
        _
      %p184 = scmp.le.s32.totalorder 1, %s16
      %p185 = scmp.lt.s32.totalorder %s16, 3
      %p186 = pnand %p184, %p185
      %p187 = pneg %p186
      // Predicated region
      $region21: #{tpu_custom_call.1} parent=5 // pred_check
        _
      $region22: #{tpu_custom_call.1} parent=5 // pred_check_branch
        %189 = sbr.rel (%p186) target = $region24
      $region23: #{tpu_custom_call.1} parent=5 // pred_region
        %s190 = ssub.s32 %s16, 1
        %s191 = sand.u32 %s43, 1
        %s192 = scalar_lea.sflag [#allocation3], %s191
        %s193 = sand.u32 %s43, 1
        %s194 = smul.addr %s193, 64
        %s195 = scalar_lea.vmem [#allocation2], %s194
        // Predicated region
        $region25: #{tpu_custom_call.1} parent=23 // pred_check
          %p196 = pneg %p56
        $region26: #{tpu_custom_call.1} parent=23 // pred_check_branch
          %198 = sbr.rel (%p196) target = $region28
        $region27: #{tpu_custom_call.1} parent=23 // pred_region
          %200 = dma.done %s192, 1024
        $region28: #{tpu_custom_call.1} parent=23 // pred_fallthru
          _
        %s201 = sand.u32 %s43, 1
        %s202 = scalar_lea.sflag [#allocation3], %s201
        %s203 = sand.u32 %s43, 1
        %s204 = smul.addr %s203, 64
        %s205 = scalar_lea.vmem [#allocation2], %s204
        %p206 = pneg %p56
        %p207 = pneg %p53
        %p208 = pneg %p84
        %p209 = pneg %p81
        %s210 = smul.u32 4, %s26
        %p211 = scmp.lt.s32.totalorder %s25, 1
        %s212 = scalar_select %p211, %s25, 1
        %p213 = scmp.lt.s32.totalorder %s210, 3
        %s214 = scalar_select %p213, %s210, 3
        %s215 = smul.addr %s212, 4
        %s216 = sadd.s32 %s214, %s215
        %s217 = scalar_lea.vmem %s1, %s216
        %p218 = pneg %p112
        %p219 = pneg %p109
        %s220 = smul.u32 4, %s26
        %p221 = scmp.lt.s32.totalorder %s25, 1
        %s222 = scalar_select %p221, %s25, 1
        %p223 = scmp.lt.s32.totalorder %s220, 3
        %s224 = scalar_select %p223, %s220, 3
        %s225 = smul.addr %s222, 4
        %s226 = sadd.s32 %s224, %s225
        %s227 = smul.addr %s226, 2
        %s228 = scalar_lea.vmem %s2, %s227
        %p229 = pneg %p140
        %p230 = pneg %p137
        %s231 = sand.u32 %s127, 1
        %s232 = scalar_lea.sflag [#allocation4], %s231
        %s233 = sand.u32 %s127, 1
        %s234 = smul.addr %s233, 16
        %s235 = scalar_lea.vmem [#allocation5], %s234
        %s236 = smul.u32 4, %s26
        %s237 = smul.u32 4, %s26
        %p238 = scmp.lt.s32.totalorder %s25, 1
        %s239 = scalar_select %p238, %s25, 1
        %p240 = scmp.lt.s32.totalorder %s237, 3
        %s241 = scalar_select %p240, %s237, 3
        %s242 = smul.addr %s239, 4
        %s243 = sadd.s32 %s241, %s242
        %s244 = scalar_lea.vmem %s1, %s243
        %s245 = smul.u32 4, %s26
        %s246 = smul.u32 4, %s26
        %p247 = scmp.lt.s32.totalorder %s25, 1
        %s248 = scalar_select %p247, %s25, 1
        %p249 = scmp.lt.s32.totalorder %s246, 3
        %s250 = scalar_select %p249, %s246, 3
        %s251 = smul.addr %s248, 4
        %s252 = sadd.s32 %s250, %s251
        %s253 = smul.addr %s252, 2
        %s254 = scalar_lea.vmem %s2, %s253
        %s255 = smul.u32 4, %s26
        %s256 = smul.u32 4, %s26
        %v257 = vld [vmem:[%s195] sm:$0xff]
        %v258 = vld [vmem:[%s195 + $0x8] sm:$0xff]
        %v259 = vld [vmem:[%s195 + $0x10] sm:$0xff]
        %v260 = vld [vmem:[%s195 + $0x18] sm:$0xff]
        %v261 = vld [vmem:[%s195 + $0x20] sm:$0xff]
        %v262 = vld [vmem:[%s195 + $0x28] sm:$0xff]
        %v263 = vld [vmem:[%s195 + $0x30] sm:$0xff]
        %v264 = vld [vmem:[%s195 + $0x38] sm:$0xff]
        %vm265 = vcmask 130048
        %v266 = vsel %vm265, %v257, -inf
        %v267 = vsel %vm265, %v258, -inf
        %v268 = vmax.f32 %v266, %v267
        %v269 = vrot.slane %v268, 4
        %v270 = vmax.f32 %v268, %v269
        %v271 = vrot.slane %v270, 2
        %v272 = vmax.f32 %v270, %v271
        %v273 = vrot.slane %v272, 1
        %v274 = vmax.f32 %v272, %v273
        %v275 = vsel %vm265, %v259, -inf
        %v276 = vsel %vm265, %v260, -inf
        %v277 = vmax.f32 %v275, %v276
        %v278 = vrot.slane %v277, 4
        %v279 = vmax.f32 %v277, %v278
        %v280 = vrot.slane %v279, 2
        %v281 = vmax.f32 %v279, %v280
        %v282 = vrot.slane %v281, 1
        %v283 = vmax.f32 %v281, %v282
        %v284 = vsel %vm265, %v261, -inf
        %v285 = vsel %vm265, %v262, -inf
        %v286 = vmax.f32 %v284, %v285
        %v287 = vrot.slane %v286, 4
        %v288 = vmax.f32 %v286, %v287
        %v289 = vrot.slane %v288, 2
        %v290 = vmax.f32 %v288, %v289
        %v291 = vrot.slane %v290, 1
        %v292 = vmax.f32 %v290, %v291
        %v293 = vsel %vm265, %v263, -inf
        %v294 = vsel %vm265, %v264, -inf
        %v295 = vmax.f32 %v293, %v294
        %v296 = vrot.slane %v295, 4
        %v297 = vmax.f32 %v295, %v296
        %v298 = vrot.slane %v297, 2
        %v299 = vmax.f32 %v297, %v298
        %v300 = vrot.slane %v299, 1
        %v301 = vmax.f32 %v299, %v300
        %v302 = vlaneseq
        %v303 = vshrl.u32 %v302, 7
        %vm304 = vcmp.eq.s32.totalorder %v303, 0
        %v305 = vsel %vm304, %v274, 0.0
        %v306 = vsel %vm304, %v283, 0.0
        %v307 = vsel %vm304, %v292, 0.0
        %v308 = vsel %vm304, %v301, 0.0
        %vm309 = vcmask 122880
        %v310 = vsel %vm309, %v305, -inf
        %311 = vmax.xlane.f32.xlu0 %v310
        %v312 = vpop.xlane.xlu0 %311
        %v313 = vsel %vm309, %v306, -inf
        %314 = vmax.xlane.f32.xlu0 %v313
        %v315 = vpop.xlane.xlu0 %314
        %v316 = vsel %vm309, %v307, -inf
        %317 = vmax.xlane.f32.xlu0 %v316
        %v318 = vpop.xlane.xlu0 %317
        %v319 = vsel %vm309, %v308, -inf
        %320 = vmax.xlane.f32.xlu0 %v319
        %v321 = vpop.xlane.xlu0 %320
        %v322 = vlaneseq
        %v323 = vand.u32 %v322, 127
        %vm324 = vcmp.eq.s32.totalorder %v323, 0
        %v325 = vsel %vm324, %v312, 0.0
        %v326 = vsel %vm324, %v315, 0.0
        %v327 = vsel %vm324, %v318, 0.0
        %v328 = vsel %vm324, %v321, 0.0
        %vm329 = vcmask 0
        %330 = vst.msk [vmem:[%s244] sm:$0x1] %vm329, %v325
        %331 = vst.msk [vmem:[%s244 + $0x1] sm:$0x1] %vm329, %v326
        %332 = vst.msk [vmem:[%s244 + $0x2] sm:$0x1] %vm329, %v327
        %333 = vst.msk [vmem:[%s244 + $0x3] sm:$0x1] %vm329, %v328
        %v334 = vld [vmem:[%s195] sm:$0xff]
        %v335 = vld [vmem:[%s195 + $0x10] sm:$0xff]
        %v336 = vld [vmem:[%s195 + $0x20] sm:$0xff]
        %v337 = vld [vmem:[%s195 + $0x30] sm:$0xff]
        %v338 = vsel %vm265, %v334, -inf
        %v339 = vrot.slane %v338, 4
        %v340 = vmax.f32 %v338, %v339
        %v341 = vrot.slane %v340, 2
        %v342 = vmax.f32 %v340, %v341
        %v343 = vrot.slane %v342, 1
        %v344 = vmax.f32 %v342, %v343
        %v345 = vsel %vm265, %v335, -inf
        %v346 = vrot.slane %v345, 4
        %v347 = vmax.f32 %v345, %v346
        %v348 = vrot.slane %v347, 2
        %v349 = vmax.f32 %v347, %v348
        %v350 = vrot.slane %v349, 1
        %v351 = vmax.f32 %v349, %v350
        %v352 = vsel %vm265, %v336, -inf
        %v353 = vrot.slane %v352, 4
        %v354 = vmax.f32 %v352, %v353
        %v355 = vrot.slane %v354, 2
        %v356 = vmax.f32 %v354, %v355
        %v357 = vrot.slane %v356, 1
        %v358 = vmax.f32 %v356, %v357
        %v359 = vsel %vm265, %v337, -inf
        %v360 = vrot.slane %v359, 4
        %v361 = vmax.f32 %v359, %v360
        %v362 = vrot.slane %v361, 2
        %v363 = vmax.f32 %v361, %v362
        %v364 = vrot.slane %v363, 1
        %v365 = vmax.f32 %v363, %v364
        %v366 = vsel %vm304, %v344, 0.0
        %v367 = vsel %vm304, %v351, 0.0
        %v368 = vsel %vm304, %v358, 0.0
        %v369 = vsel %vm304, %v365, 0.0
        %v370 = vld [vmem:[%s195 + $0x8] sm:$0xff]
        %v371 = vld [vmem:[%s195 + $0x18] sm:$0xff]
        %v372 = vld [vmem:[%s195 + $0x28] sm:$0xff]
        %v373 = vld [vmem:[%s195 + $0x38] sm:$0xff]
        %v374 = vsel %vm265, %v370, -inf
        %v375 = vrot.slane %v374, 4
        %v376 = vmax.f32 %v374, %v375
        %v377 = vrot.slane %v376, 2
        %v378 = vmax.f32 %v376, %v377
        %v379 = vrot.slane %v378, 1
        %v380 = vmax.f32 %v378, %v379
        %v381 = vsel %vm265, %v371, -inf
        %v382 = vrot.slane %v381, 4
        %v383 = vmax.f32 %v381, %v382
        %v384 = vrot.slane %v383, 2
        %v385 = vmax.f32 %v383, %v384
        %v386 = vrot.slane %v385, 1
        %v387 = vmax.f32 %v385, %v386
        %v388 = vsel %vm265, %v372, -inf
        %v389 = vrot.slane %v388, 4
        %v390 = vmax.f32 %v388, %v389
        %v391 = vrot.slane %v390, 2
        %v392 = vmax.f32 %v390, %v391
        %v393 = vrot.slane %v392, 1
        %v394 = vmax.f32 %v392, %v393
        %v395 = vsel %vm265, %v373, -inf
        %v396 = vrot.slane %v395, 4
        %v397 = vmax.f32 %v395, %v396
        %v398 = vrot.slane %v397, 2
        %v399 = vmax.f32 %v397, %v398
        %v400 = vrot.slane %v399, 1
        %v401 = vmax.f32 %v399, %v400
        %vm402 = vcmp.eq.s32.totalorder %v303, 1
        %v403 = vsel %vm402, %v380, %v366
        %v404 = vsel %vm402, %v387, %v367
        %v405 = vsel %vm402, %v394, %v368
        %v406 = vsel %vm402, %v401, %v369
        %vm407 = vcmask 58368
        %v408 = vsel %vm407, %v403, -inf
        %409 = vmax.xlane.f32.xlu0 %v408
        %v410 = vpop.xlane.xlu0 %409
        %v411 = vsel %vm407, %v404, -inf
        %412 = vmax.xlane.f32.xlu0 %v411
        %v413 = vpop.xlane.xlu0 %412
        %v414 = vsel %vm407, %v405, -inf
        %415 = vmax.xlane.f32.xlu0 %v414
        %v416 = vpop.xlane.xlu0 %415
        %v417 = vsel %vm407, %v406, -inf
        %418 = vmax.xlane.f32.xlu0 %v417
        %v419 = vpop.xlane.xlu0 %418
        %v420 = vsel %vm324, %v410, 0.0
        %v421 = vsel %vm324, %v413, 0.0
        %v422 = vsel %vm324, %v416, 0.0
        %v423 = vsel %vm324, %v419, 0.0
        %vm424 = vcmask 123968
        %v425 = vsel %vm424, %v403, -inf
        %426 = vmax.xlane.f32.xlu0 %v425
        %v427 = vpop.xlane.xlu0 %426
        %v428 = vsel %vm424, %v404, -inf
        %429 = vmax.xlane.f32.xlu0 %v428
        %v430 = vpop.xlane.xlu0 %429
        %v431 = vsel %vm424, %v405, -inf
        %432 = vmax.xlane.f32.xlu0 %v431
        %v433 = vpop.xlane.xlu0 %432
        %v434 = vsel %vm424, %v406, -inf
        %435 = vmax.xlane.f32.xlu0 %v434
        %v436 = vpop.xlane.xlu0 %435
        %vm437 = vcmp.eq.s32.totalorder %v323, 1
        %v438 = vsel %vm437, %v427, %v420
        %v439 = vsel %vm437, %v430, %v421
        %v440 = vsel %vm437, %v433, %v422
        %v441 = vsel %vm437, %v436, %v423
        %vm442 = vcmask 9216
        %443 = vst.msk [vmem:[%s254] sm:$0x3] %vm442, %v438
        %444 = vst.msk [vmem:[%s254 + $0x2] sm:$0x3] %vm442, %v439
        %445 = vst.msk [vmem:[%s254 + $0x4] sm:$0x3] %vm442, %v440
        %446 = vst.msk [vmem:[%s254 + $0x6] sm:$0x3] %vm442, %v441
        %v447 = vld [vmem:[%s195] sm:$0xf]
        %v448 = vld [vmem:[%s195 + $0x10] sm:$0xf]
        %v449 = vld [vmem:[%s195 + $0x20] sm:$0xf]
        %v450 = vld [vmem:[%s195 + $0x30] sm:$0xf]
        %vm451 = vcmask 125952
        %v452 = vsel %vm451, %v447, -inf
        %v453 = vrot.slane %v452, 4
        %v454 = vmax.f32 %v452, %v453
        %v455 = vrot.slane %v454, 2
        %v456 = vmax.f32 %v454, %v455
        %v457 = vrot.slane %v456, 1
        %v458 = vmax.f32 %v456, %v457
        %v459 = vsel %vm451, %v448, -inf
        %v460 = vrot.slane %v459, 4
        %v461 = vmax.f32 %v459, %v460
        %v462 = vrot.slane %v461, 2
        %v463 = vmax.f32 %v461, %v462
        %v464 = vrot.slane %v463, 1
        %v465 = vmax.f32 %v463, %v464
        %v466 = vsel %vm451, %v449, -inf
        %v467 = vrot.slane %v466, 4
        %v468 = vmax.f32 %v466, %v467
        %v469 = vrot.slane %v468, 2
        %v470 = vmax.f32 %v468, %v469
        %v471 = vrot.slane %v470, 1
        %v472 = vmax.f32 %v470, %v471
        %v473 = vsel %vm451, %v450, -inf
        %v474 = vrot.slane %v473, 4
        %v475 = vmax.f32 %v473, %v474
        %v476 = vrot.slane %v475, 2
        %v477 = vmax.f32 %v475, %v476
        %v478 = vrot.slane %v477, 1
        %v479 = vmax.f32 %v477, %v478
        %v480 = vsel %vm304, %v458, 0.0
        %v481 = vsel %vm304, %v465, 0.0
        %v482 = vsel %vm304, %v472, 0.0
        %v483 = vsel %vm304, %v479, 0.0
        %v484 = vld [vmem:[%s195 + $0x4] sm:$0xf]
        %v485 = vld [vmem:[%s195 + $0x14] sm:$0xf]
        %v486 = vld [vmem:[%s195 + $0x24] sm:$0xf]
        %v487 = vld [vmem:[%s195 + $0x34] sm:$0xf]
        %v488 = vsel %vm451, %v484, -inf
        %v489 = vrot.slane %v488, 4
        %v490 = vmax.f32 %v488, %v489
        %v491 = vrot.slane %v490, 2
        %v492 = vmax.f32 %v490, %v491
        %v493 = vrot.slane %v492, 1
        %v494 = vmax.f32 %v492, %v493
        %v495 = vsel %vm451, %v485, -inf
        %v496 = vrot.slane %v495, 4
        %v497 = vmax.f32 %v495, %v496
        %v498 = vrot.slane %v497, 2
        %v499 = vmax.f32 %v497, %v498
        %v500 = vrot.slane %v499, 1
        %v501 = vmax.f32 %v499, %v500
        %v502 = vsel %vm451, %v486, -inf
        %v503 = vrot.slane %v502, 4
        %v504 = vmax.f32 %v502, %v503
        %v505 = vrot.slane %v504, 2
        %v506 = vmax.f32 %v504, %v505
        %v507 = vrot.slane %v506, 1
        %v508 = vmax.f32 %v506, %v507
        %v509 = vsel %vm451, %v487, -inf
        %v510 = vrot.slane %v509, 4
        %v511 = vmax.f32 %v509, %v510
        %v512 = vrot.slane %v511, 2
        %v513 = vmax.f32 %v511, %v512
        %v514 = vrot.slane %v513, 1
        %v515 = vmax.f32 %v513, %v514
        %v516 = vsel %vm402, %v494, %v480
        %v517 = vsel %vm402, %v501, %v481
        %v518 = vsel %vm402, %v508, %v482
        %v519 = vsel %vm402, %v515, %v483
        %v520 = vld [vmem:[%s195 + $0x8] sm:$0xf]
        %v521 = vld [vmem:[%s195 + $0x18] sm:$0xf]
        %v522 = vld [vmem:[%s195 + $0x28] sm:$0xf]
        %v523 = vld [vmem:[%s195 + $0x38] sm:$0xf]
        %v524 = vsel %vm451, %v520, -inf
        %v525 = vrot.slane %v524, 4
        %v526 = vmax.f32 %v524, %v525
        %v527 = vrot.slane %v526, 2
        %v528 = vmax.f32 %v526, %v527
        %v529 = vrot.slane %v528, 1
        %v530 = vmax.f32 %v528, %v529
        %v531 = vsel %vm451, %v521, -inf
        %v532 = vrot.slane %v531, 4
        %v533 = vmax.f32 %v531, %v532
        %v534 = vrot.slane %v533, 2
        %v535 = vmax.f32 %v533, %v534
        %v536 = vrot.slane %v535, 1
        %v537 = vmax.f32 %v535, %v536
        %v538 = vsel %vm451, %v522, -inf
        %v539 = vrot.slane %v538, 4
        %v540 = vmax.f32 %v538, %v539
        %v541 = vrot.slane %v540, 2
        %v542 = vmax.f32 %v540, %v541
        %v543 = vrot.slane %v542, 1
        %v544 = vmax.f32 %v542, %v543
        %v545 = vsel %vm451, %v523, -inf
        %v546 = vrot.slane %v545, 4
        %v547 = vmax.f32 %v545, %v546
        %v548 = vrot.slane %v547, 2
        %v549 = vmax.f32 %v547, %v548
        %v550 = vrot.slane %v549, 1
        %v551 = vmax.f32 %v549, %v550
        %vm552 = vcmp.eq.s32.totalorder %v303, 2
        %v553 = vsel %vm552, %v530, %v516
        %v554 = vsel %vm552, %v537, %v517
        %v555 = vsel %vm552, %v544, %v518
        %v556 = vsel %vm552, %v551, %v519
        %v557 = vld [vmem:[%s195 + $0xc] sm:$0xf]
        %v558 = vld [vmem:[%s195 + $0x1c] sm:$0xf]
        %v559 = vld [vmem:[%s195 + $0x2c] sm:$0xf]
        %v560 = vld [vmem:[%s195 + $0x3c] sm:$0xf]
        %v561 = vsel %vm451, %v557, -inf
        %v562 = vrot.slane %v561, 4
        %v563 = vmax.f32 %v561, %v562
        %v564 = vrot.slane %v563, 2
        %v565 = vmax.f32 %v563, %v564
        %v566 = vrot.slane %v565, 1
        %v567 = vmax.f32 %v565, %v566
        %v568 = vsel %vm451, %v558, -inf
        %v569 = vrot.slane %v568, 4
        %v570 = vmax.f32 %v568, %v569
        %v571 = vrot.slane %v570, 2
        %v572 = vmax.f32 %v570, %v571
        %v573 = vrot.slane %v572, 1
        %v574 = vmax.f32 %v572, %v573
        %v575 = vsel %vm451, %v559, -inf
        %v576 = vrot.slane %v575, 4
        %v577 = vmax.f32 %v575, %v576
        %v578 = vrot.slane %v577, 2
        %v579 = vmax.f32 %v577, %v578
        %v580 = vrot.slane %v579, 1
        %v581 = vmax.f32 %v579, %v580
        %v582 = vsel %vm451, %v560, -inf
        %v583 = vrot.slane %v582, 4
        %v584 = vmax.f32 %v582, %v583
        %v585 = vrot.slane %v584, 2
        %v586 = vmax.f32 %v584, %v585
        %v587 = vrot.slane %v586, 1
        %v588 = vmax.f32 %v586, %v587
        %vm589 = vcmp.eq.s32.totalorder %v303, 3
        %v590 = vsel %vm589, %v567, %v553
        %v591 = vsel %vm589, %v574, %v554
        %v592 = vsel %vm589, %v581, %v555
        %v593 = vsel %vm589, %v588, %v556
        %vm594 = vcmask 27648
        %v595 = vsel %vm594, %v590, -inf
        %596 = vmax.xlane.f32.xlu0 %v595
        %v597 = vpop.xlane.xlu0 %596
        %v598 = vsel %vm594, %v591, -inf
        %599 = vmax.xlane.f32.xlu0 %v598
        %v600 = vpop.xlane.xlu0 %599
        %v601 = vsel %vm594, %v592, -inf
        %602 = vmax.xlane.f32.xlu0 %v601
        %v603 = vpop.xlane.xlu0 %602
        %v604 = vsel %vm594, %v593, -inf
        %605 = vmax.xlane.f32.xlu0 %v604
        %v606 = vpop.xlane.xlu0 %605
        %v607 = vsel %vm324, %v597, 0.0
        %v608 = vsel %vm324, %v600, 0.0
        %v609 = vsel %vm324, %v603, 0.0
        %v610 = vsel %vm324, %v606, 0.0
        %vm611 = vcmask 60448
        %v612 = vsel %vm611, %v590, -inf
        %613 = vmax.xlane.f32.xlu0 %v612
        %v614 = vpop.xlane.xlu0 %613
        %v615 = vsel %vm611, %v591, -inf
        %616 = vmax.xlane.f32.xlu0 %v615
        %v617 = vpop.xlane.xlu0 %616
        %v618 = vsel %vm611, %v592, -inf
        %619 = vmax.xlane.f32.xlu0 %v618
        %v620 = vpop.xlane.xlu0 %619
        %v621 = vsel %vm611, %v593, -inf
        %622 = vmax.xlane.f32.xlu0 %v621
        %v623 = vpop.xlane.xlu0 %622
        %v624 = vsel %vm437, %v614, %v607
        %v625 = vsel %vm437, %v617, %v608
        %v626 = vsel %vm437, %v620, %v609
        %v627 = vsel %vm437, %v623, %v610
        %vm628 = vcmask 93248
        %v629 = vsel %vm628, %v590, -inf
        %630 = vmax.xlane.f32.xlu0 %v629
        %v631 = vpop.xlane.xlu0 %630
        %v632 = vsel %vm628, %v591, -inf
        %633 = vmax.xlane.f32.xlu0 %v632
        %v634 = vpop.xlane.xlu0 %633
        %v635 = vsel %vm628, %v592, -inf
        %636 = vmax.xlane.f32.xlu0 %v635
        %v637 = vpop.xlane.xlu0 %636
        %v638 = vsel %vm628, %v593, -inf
        %639 = vmax.xlane.f32.xlu0 %v638
        %v640 = vpop.xlane.xlu0 %639
        %vm641 = vcmp.eq.s32.totalorder %v323, 2
        %v642 = vsel %vm641, %v631, %v624
        %v643 = vsel %vm641, %v634, %v625
        %v644 = vsel %vm641, %v637, %v626
        %v645 = vsel %vm641, %v640, %v627
        %vm646 = vcmask 126048
        %v647 = vsel %vm646, %v590, -inf
        %648 = vmax.xlane.f32.xlu0 %v647
        %v649 = vpop.xlane.xlu0 %648
        %v650 = vsel %vm646, %v591, -inf
        %651 = vmax.xlane.f32.xlu0 %v650
        %v652 = vpop.xlane.xlu0 %651
        %v653 = vsel %vm646, %v592, -inf
        %654 = vmax.xlane.f32.xlu0 %v653
        %v655 = vpop.xlane.xlu0 %654
        %v656 = vsel %vm646, %v593, -inf
        %657 = vmax.xlane.f32.xlu0 %v656
        %v658 = vpop.xlane.xlu0 %657
        %vm659 = vcmp.eq.s32.totalorder %v323, 3
        %v660 = vsel %vm659, %v649, %v642
        %v661 = vsel %vm659, %v652, %v643
        %v662 = vsel %vm659, %v655, %v644
        %v663 = vsel %vm659, %v658, %v645
        %664 = vst.msk [vmem:[%s235] sm:$0xf] %vm594, %v660
        %665 = vst.msk [vmem:[%s235 + $0x4] sm:$0xf] %vm594, %v661
        %666 = vst.msk [vmem:[%s235 + $0x8] sm:$0xf] %vm594, %v662
        %667 = vst.msk [vmem:[%s235 + $0xc] sm:$0xf] %vm594, %v663
        %s668 = smul.u32 4, %s26
        %p669 = scmp.lt.s32.totalorder %s25, 1
        %s670 = scalar_select %p669, %s25, 1
        %p671 = scmp.lt.s32.totalorder %s668, 3
        %s672 = scalar_select %p671, %s668, 3
        %s673 = smul.addr %s670, 4
        %s674 = sadd.s32 %s672, %s673
        %s675 = scalar_lea.vmem %s1, %s674
        %s676 = smul.u32 4, %s26
        %p677 = scmp.lt.s32.totalorder %s25, 1
        %s678 = scalar_select %p677, %s25, 1
        %p679 = scmp.lt.s32.totalorder %s676, 3
        %s680 = scalar_select %p679, %s676, 3
        %s681 = smul.addr %s678, 4
        %s682 = sadd.s32 %s680, %s681
        %s683 = smul.addr %s682, 2
        %s684 = scalar_lea.vmem %s2, %s683
        %s685 = sand.u32 %s127, 1
        %s686 = scalar_lea.sflag [#allocation4], %s685
        %s687 = sand.u32 %s127, 1
        %s688 = smul.addr %s687, 16
        %s689 = scalar_lea.vmem [#allocation5], %s688
        // Predicated region
        $region29: #{tpu_custom_call.1} parent=23 // pred_check
          %p690 = pneg %p81
        $region30: #{tpu_custom_call.1} parent=23 // pred_check_branch
          %692 = sbr.rel (%p690) target = $region32
        $region31: #{tpu_custom_call.1} parent=23 // pred_region
          %s693 = smul.u32 4, %s26
        $region32: #{tpu_custom_call.1} parent=23 // pred_fallthru
          _
        // Predicated region
        $region33: #{tpu_custom_call.1} parent=23 // pred_check
          %p694 = pneg %p109
        $region34: #{tpu_custom_call.1} parent=23 // pred_check_branch
          %696 = sbr.rel (%p694) target = $region36
        $region35: #{tpu_custom_call.1} parent=23 // pred_region
          %s697 = smul.u32 4, %s26
        $region36: #{tpu_custom_call.1} parent=23 // pred_fallthru
          _
        // Predicated region
        $region37: #{tpu_custom_call.1} parent=23 // pred_check
          %p698 = pneg %p137
        $region38: #{tpu_custom_call.1} parent=23 // pred_check_branch
          %700 = sbr.rel (%p698) target = $region40
        $region39: #{tpu_custom_call.1} parent=23 // pred_region
          %s701 = smul.u32 4, %s26
          %703 = vsyncadd %s686, 0
          %s704 = smul.addr %s25, 4
          %s705 = sadd.s32 %s701, %s704
          %s706 = smul.addr %s705, 4
          %s707 = scalar_lea.hbm %s3, %s706
          %s708 = sshll.u32 %s689, 4
          %s709 = int_to_ptr.vmem [resolvable:$true] %s708
          %s710 = sshll.u32 %s707, 4
          %s711 = int_to_ptr.hbm [resolvable:$true] %s710
          %716 = dma.vmem_to_hbm [thread:$0]  %s709, 256, %s711, %s686, 64, 64, 4
        $region40: #{tpu_custom_call.1} parent=23 // pred_fallthru
          _
      $region24: #{tpu_custom_call.1} parent=5 // pred_fallthru
        _
      %p717 = scmp.le.s32.totalorder 2, %s16
      // Predicated region
      $region41: #{tpu_custom_call.1} parent=5 // pred_check
        %p718 = pneg %p717
      $region42: #{tpu_custom_call.1} parent=5 // pred_check_branch
        %720 = sbr.rel (%p718) target = $region44
      $region43: #{tpu_custom_call.1} parent=5 // pred_region
        %s721 = ssub.s32 %s16, 2
        // Predicated region
        $region45: #{tpu_custom_call.1} parent=43 // pred_check
          %p722 = pneg %p87
        $region46: #{tpu_custom_call.1} parent=43 // pred_check_branch
          %724 = sbr.rel (%p722) target = $region48
        $region47: #{tpu_custom_call.1} parent=43 // pred_region
          %s725 = smul.u32 4, %s28
          %p726 = scmp.lt.s32.totalorder %s27, 1
          %s727 = scalar_select %p726, %s27, 1
          %p728 = scmp.lt.s32.totalorder %s725, 3
          %s729 = scalar_select %p728, %s725, 3
          %s730 = smul.addr %s727, 4
          %s731 = sadd.s32 %s729, %s730
          %s732 = scalar_lea.vmem %s1, %s731
        $region48: #{tpu_custom_call.1} parent=43 // pred_fallthru
          _
        // Predicated region
        $region49: #{tpu_custom_call.1} parent=43 // pred_check
          %p733 = pneg %p115
        $region50: #{tpu_custom_call.1} parent=43 // pred_check_branch
          %735 = sbr.rel (%p733) target = $region52
        $region51: #{tpu_custom_call.1} parent=43 // pred_region
          %s736 = smul.u32 4, %s28
          %p737 = scmp.lt.s32.totalorder %s27, 1
          %s738 = scalar_select %p737, %s27, 1
          %p739 = scmp.lt.s32.totalorder %s736, 3
          %s740 = scalar_select %p739, %s736, 3
          %s741 = smul.addr %s738, 4
          %s742 = sadd.s32 %s740, %s741
          %s743 = smul.addr %s742, 2
          %s744 = scalar_lea.vmem %s2, %s743
        $region52: #{tpu_custom_call.1} parent=43 // pred_fallthru
          _
        // Predicated region
        $region53: #{tpu_custom_call.1} parent=43 // pred_check
          %p745 = pneg %p143
        $region54: #{tpu_custom_call.1} parent=43 // pred_check_branch
          %747 = sbr.rel (%p745) target = $region56
        $region55: #{tpu_custom_call.1} parent=43 // pred_region
          %s748 = sand.u32 %s128, 1
          %s749 = scalar_lea.sflag [#allocation4], %s748
          %s750 = sand.u32 %s128, 1
          %s751 = smul.addr %s750, 16
          %s752 = scalar_lea.vmem [#allocation5], %s751
          %754 = dma.done %s749, 256
        $region56: #{tpu_custom_call.1} parent=43 // pred_fallthru
          _
      $region44: #{tpu_custom_call.1} parent=5 // pred_fallthru
        _
    $region6: #{tpu_custom_call.1} parent=1 // loop_footer
      %s20 = sadd.s32 1, %s16
    $region7: #{tpu_custom_call.1} parent=1 // loop_footer_branch
      %15 = sbr.rel target = $region3
    $region8: #{tpu_custom_call.1} parent=1 // loop_exit
      _
    %755 = vsyncpa [#allocation3], 1
    %s756 = scalar_lea.sflag [#allocation3], 1
    %757 = vsyncpa %s756, 1
    %758 = vsyncpa [#allocation4], 1
    %s759 = scalar_lea.sflag [#allocation4], 1
    %760 = vsyncpa %s759, 1

</llo_original>
